<compile_context>
chip_gen: v7x
topology: tpu7x:2x2x1
jax: 0.10.0
libtpu: 0.0.40
codegen_flags: <defaults>
</compile_context>

<pallas_src>
import functools
import math

import jax
import jax.numpy as jnp
from jax.experimental import pallas as pl
from jax.experimental.pallas import tpu as pltpu


def _copy_kernel(x_hbm_ref, o_hbm_ref, copy_sems, *, num_chunks, chunk_rows):
    """HBM->HBM copy of the input slab, split into `num_chunks` row chunks.

    All chunk DMAs are started before any wait so multiple descriptors are
    outstanding simultaneously (hides per-descriptor issue latency and uses
    more DMA queues on v7x/v6e).
    """
    copies = []
    for k in range(num_chunks):  # static Python loop: num_chunks is trace-time
        rows = pl.ds(k * chunk_rows, chunk_rows)
        cp = pltpu.make_async_copy(
            x_hbm_ref.at[rows], o_hbm_ref.at[rows], copy_sems.at[k]
        )
        cp.start()
        copies.append(cp)
    for cp in copies:
        cp.wait()


def _pick_num_chunks(lead_rows: int, total_bytes: int,
                     max_chunks: int = 8, min_chunk_bytes: int = 8 << 20) -> int:
    """Choose how many concurrent DMA chunks to issue (row-aligned, static)."""
    if lead_rows <= 1 or total_bytes < 2 * min_chunk_bytes:
        return 1
    for k in range(max_chunks, 1, -1):
        if lead_rows % k == 0 and (total_bytes // k) >= min_chunk_bytes:
            return k
    return 1


def flatten(x: jax.Array, *, copy: bool = False, num_chunks: int | None = None):
    """Pallas equivalent of the PyTorch Flatten module's forward().

    copy=False  -> metadata-only reshape (no kernel, no HBM traffic).
    copy=True   -> produce a physically distinct output via a Pallas HBM->HBM
                   DMA copy kernel, then apply the free reshape to its output.
    """
    # Semantic branch from the PyTorch module (shapes are static under trace).
    if x.ndim == 1:
        out_shape_2d = (1, x.shape[0])                       # unsqueeze(dim=0)
    else:
        out_shape_2d = (x.shape[0], math.prod(x.shape[1:]))  # reshape(size(0), -1)

    if not copy:
        # Hot path: no copy beats any copy.
        return x.reshape(out_shape_2d)

    total_bytes = x.size * x.dtype.itemsize
    lead = x.shape[0]
    k = num_chunks if num_chunks is not None else _pick_num_chunks(lead, total_bytes)
    if k < 1 or lead % k != 0:
        k = 1
    chunk_rows = lead // k

    kernel = functools.partial(_copy_kernel, num_chunks=k, chunk_rows=chunk_rows)

    y = pl.pallas_call(
        kernel,
        # Copy at the ORIGINAL shape; reshape the output afterwards (free).
        out_shape=jax.ShapeDtypeStruct(x.shape, x.dtype),
        in_specs=[pl.BlockSpec(memory_space=pl.ANY)],    # stays in HBM
        out_specs=pl.BlockSpec(memory_space=pl.ANY),     # written directly in HBM
        scratch_shapes=[pltpu.SemaphoreType.DMA((k,))],
        cost_estimate=pl.CostEstimate(
            flops=0, transcendentals=0, bytes_accessed=2 * total_bytes
        ),
    )(x)

    # Row-major flatten order matches torch.reshape on contiguous data; this
    # post-kernel reshape is metadata-only.
    return y.reshape(out_shape_2d)


if __name__ == "__main__":
    key = jax.random.PRNGKey(0)
    k1, k2, k3 = jax.random.split(key, 3)

    # 4-D NCHW input: batch=2, channels=4, spatial=16x16.
    x = jax.random.normal(k1, (2, 4, 16, 16), dtype=jnp.float32)
    y_fast = flatten(x)                 # hot path: metadata-only reshape
    y_copy = flatten(x, copy=True)      # Pallas DMA copy kernel (single chunk)
    jax.block_until_ready((y_fast, y_copy))
    assert y_fast.shape == (2, 4 * 16 * 16), y_fast.shape
    assert y_copy.shape == (2, 4 * 16 * 16), y_copy.shape
    assert jnp.array_equal(y_fast, x.reshape(2, -1)), "flatten mismatch (fast path)"
    assert jnp.array_equal(y_copy, x.reshape(2, -1)), "flatten mismatch (copy path)"

    # Multi-chunk concurrent-DMA path (forced at small scale so it compiles/runs).
    xb = jax.random.normal(k2, (8, 32, 128), dtype=jnp.float32)
    yb = flatten(xb, copy=True, num_chunks=4)
    jax.block_until_ready(yb)
    assert yb.shape == (8, 32 * 128), yb.shape
    assert jnp.array_equal(yb, xb.reshape(8, -1)), "flatten mismatch (chunked copy)"

    # 1-D input branch: returns unsqueezed (1, L).
    v = jax.random.normal(k3, (128,), dtype=jnp.float32)
    yv_fast = flatten(v)
    yv_copy = flatten(v, copy=True)
    jax.block_until_ready((yv_fast, yv_copy))
    assert yv_fast.shape == (1, 128), yv_fast.shape
    assert yv_copy.shape == (1, 128), yv_copy.shape
    assert jnp.array_equal(yv_copy, v.reshape(1, -1)), "flatten mismatch (1-D case)"

    print("KERNEL_OK")
</pallas_src>

<mosaic_0001>
module attributes {stable_mosaic.version = 11 : i64} {
  func.func @_copy_kernel(%arg0: memref<2x4x16x16xf32, #tpu.memory_space<any>>, %arg1: memref<2x4x16x16xf32, #tpu.memory_space<any>>, %arg2: memref<1x!tpu.dma_semaphore, #tpu.memory_space<semaphore_mem>>) attributes {dimension_semantics = [], scalar_prefetch = 0 : i64, scratch_operands = 1 : i64, tpu.core_type = #tpu.core_type<tc>} {
    %c0_i32 = arith.constant 0 : i32
    %c0_i32_0 = arith.constant 0 : i32
    %c0_i32_1 = arith.constant 0 : i32
    %c0_i32_2 = arith.constant 0 : i32
    %c0_i32_3 = arith.constant 0 : i32
    %0 = tpu.memref_slice %arg0[%c0_i32_0, %c0_i32_1, %c0_i32_2, %c0_i32_3] : memref<2x4x16x16xf32, #tpu.memory_space<any>> -> memref<2x4x16x16xf32, #tpu.memory_space<any>>
    %c0_i32_4 = arith.constant 0 : i32
    %c0_i32_5 = arith.constant 0 : i32
    %c0_i32_6 = arith.constant 0 : i32
    %c0_i32_7 = arith.constant 0 : i32
    %1 = tpu.memref_slice %arg1[%c0_i32_4, %c0_i32_5, %c0_i32_6, %c0_i32_7] : memref<2x4x16x16xf32, #tpu.memory_space<any>> -> memref<2x4x16x16xf32, #tpu.memory_space<any>>
    %2 = tpu.memref_slice %arg2[%c0_i32] : memref<1x!tpu.dma_semaphore, #tpu.memory_space<semaphore_mem>> -> memref<1x!tpu.dma_semaphore, #tpu.memory_space<semaphore_mem>>
    %3 = tpu.memref_squeeze %2 : memref<1x!tpu.dma_semaphore, #tpu.memory_space<semaphore_mem>> -> memref<!tpu.dma_semaphore, #tpu.memory_space<semaphore_mem>>
    tpu.enqueue_dma source(%0 : memref<2x4x16x16xf32, #tpu.memory_space<any>>) target(%1 : memref<2x4x16x16xf32, #tpu.memory_space<any>>) target_semaphore(%3 : memref<!tpu.dma_semaphore, #tpu.memory_space<semaphore_mem>>)
    %c0_i32_8 = arith.constant 0 : i32
    %c0_i32_9 = arith.constant 0 : i32
    %c0_i32_10 = arith.constant 0 : i32
    %c0_i32_11 = arith.constant 0 : i32
    %c0_i32_12 = arith.constant 0 : i32
    %4 = tpu.memref_slice %arg0[%c0_i32_9, %c0_i32_10, %c0_i32_11, %c0_i32_12] : memref<2x4x16x16xf32, #tpu.memory_space<any>> -> memref<2x4x16x16xf32, #tpu.memory_space<any>>
    %c0_i32_13 = arith.constant 0 : i32
    %c0_i32_14 = arith.constant 0 : i32
    %c0_i32_15 = arith.constant 0 : i32
    %c0_i32_16 = arith.constant 0 : i32
    %5 = tpu.memref_slice %arg1[%c0_i32_13, %c0_i32_14, %c0_i32_15, %c0_i32_16] : memref<2x4x16x16xf32, #tpu.memory_space<any>> -> memref<2x4x16x16xf32, #tpu.memory_space<any>>
    %6 = tpu.memref_slice %arg2[%c0_i32_8] : memref<1x!tpu.dma_semaphore, #tpu.memory_space<semaphore_mem>> -> memref<1x!tpu.dma_semaphore, #tpu.memory_space<semaphore_mem>>
    %7 = tpu.memref_squeeze %6 : memref<1x!tpu.dma_semaphore, #tpu.memory_space<semaphore_mem>> -> memref<!tpu.dma_semaphore, #tpu.memory_space<semaphore_mem>>
    tpu.wait_dma2 semaphore(%7 : memref<!tpu.dma_semaphore, #tpu.memory_space<semaphore_mem>>) src(%4 : memref<2x4x16x16xf32, #tpu.memory_space<any>>) dst(%5 : memref<2x4x16x16xf32, #tpu.memory_space<any>>)
    return
  }
}

</mosaic_0001>

<llo_original>
// kernel: tpu_custom_call.1
$region0: #{tpu_custom_call.1}
  #allocation0 [shape = 'u32[]', space=smem, size = 0x4, offset = 0x4, fixed_abs, tag = 'smem constant byte address 0x4 - core index']
  #allocation1 [shape = 'u32[144,128]{1,0:T(1,128)}', space=vmem, size = 0x12000, scoped, tag = 'internal scratch']
  #allocation2 [shape = 's32[1]{0}', space=sflag, size = 0x4, scoped, tag = 'scratch operand']
  #allocation3 [shape = 's32[]', space=sflag, size = 0x4, offset = 0, fixed_abs, tag = 'sflag constant byte address 0x0 - dummy sync flag']
  #allocation4 [shape = 'u32[0]{0}', space=smem, size = 0, offset = 0, fixed_abs, tag = 'smem constant byte address 0x0 - null']
  %s0 = inlined_call_operand.hbm [shape: f32[2,4,16,16], index: 0, kind: input, shape index: {}]
  %s1 = inlined_call_operand.hbm [shape: f32[2,4,16,16], index: 1, kind: output, shape index: {}]
  %s2 = sld [smem:[#allocation0]]
  $region2: #{tpu_custom_call.1} parent=0
    _
  %s4 = ssub.s32 1, %s2
  %s5 = scalar_select 0, %s4, %s2
  %s7 = sshll.u32 1, 14
  %s8 = sxor.u32 4294967295, %s7
  %s11 = sshll.u32 3, 24
  %s12 = sxor.u32 4294967295, %s11
  %s13 = sand.u32 0, %s12
  %s15 = sor.u32 %s13, 0
  %18 = dma.general %s0, 2048, %s1, [#allocation2], [#allocation3], [#allocation4], %s15, 0
  %s19 = smul.u32 2, 4
  %s20 = smul.u32 %s19, 16
  %s21 = smul.u32 %s20, 1
  %s22 = sshll.u32 %s21, 4
  %23 = dma.done [#allocation2], %s22
  %24 = vsyncmov [#allocation2]
  %s25 = vpop.sfrf %24
  %p26 = scmp.eq.s32.totalorder %s25, 0
  %p27 = pneg %p26
  %29 = shalt.err (%p27)

</llo_original>
